<compile_context>
chip_gen: v7x
topology: tpu7x:2x2x1
jax: 0.10.0
libtpu: 0.0.40
codegen_flags: <defaults>
</compile_context>

<pallas_src>
import math

import jax
import jax.numpy as jnp
from jax.experimental import pallas as pl
from jax.experimental.pallas import tpu as pltpu

# ---------------------------------------------------------------------------
# Model config (head_dim % 8 == 0, head_dim <= 128, q_heads % kv_heads == 0)
# ---------------------------------------------------------------------------
B = 2              # batch
S = 16             # sequence length
D = 64             # hidden_size
HQ = 4             # num_attention_heads
HKV = 2            # kv_heads
HD = D // HQ       # head_dim = 16
DKV = HD * HKV     # k/v projection width = 32
FF = 128           # intermediate_size
G = HQ // HKV      # query heads per kv head (= ALiBi "num_heads")
BS = B * S         # 32
WC = HQ * B * S    # 128 wide score columns: (qh, b_k, s_k)
RMS_EPS = 1.1920929e-07          # torch.finfo(float32).eps (nn.RMSNorm default)
SCALE = float(HD) ** 0.5
NEG = -1e9                       # cross-batch mask value (exp() underflows to 0)


def _layer_kernel(x_ref, g1_ref, wqkv_ref, bqkv_ref, wo_ref, g2_ref,
                  wgu_ref, w2_ref, m2_ref, bias_ref, o_ref):
    f32 = jnp.float32
    bf16 = jnp.bfloat16

    x = x_ref[...]                                               # (BS, D) f32

    # ---------------- RMSNorm (input_layernorm) ----------------
    xn = x * jax.lax.rsqrt(jnp.mean(x * x, axis=-1, keepdims=True) + RMS_EPS)
    xn = xn * g1_ref[...]

    # ---- fused projection -> [ Q/sqrt(HD) | Kdup | Vdup ]  (one MXU issue) ----
    # Kdup/Vdup columns are already duplicated per query head (host-side prep),
    # so column block qh holds the K/V of kv head qh // G.
    qkv = jnp.dot(xn.astype(bf16), wqkv_ref[...],
                  preferred_element_type=f32) + bqkv_ref[...]    # (BS, 3*D)

    q_b = qkv[:, :D].astype(bf16)                                # (32, 64)
    kdup = qkv[:, D:2 * D]                                       # (32, 64) f32
    vdup = qkv[:, 2 * D:3 * D]                                   # (32, 64) f32

    m2 = m2_ref[...]                                             # (WC, D) bf16 0/1
    m2f = m2.astype(f32)

    # Block-diagonal K / V operands for the single wide attention matmuls:
    #   row rho = qh*B*S + b_k*S + s_k ; col j = qh'*HD + d ; nonzero iff qh == qh'.
    # Full-width row replication (no lane shuffles) + one precomputed mask.
    k_bd = (jnp.concatenate([kdup] * HQ, axis=0) * m2f).astype(bf16)   # (128, 64)
    v_bd = (jnp.concatenate([vdup] * HQ, axis=0) * m2f).astype(bf16)   # (128, 64)

    # ---- scores[r=(b,s_q), rho=(qh,b_k,s_k)]: ONE matmul for all batches/heads ----
    scores = jax.lax.dot_general(q_b, k_bd, (((1,), (1,)), ((), ())),
                                 preferred_element_type=f32)           # (32, 128)
    scores = scores + bias_ref[...]          # ALiBi + cross-batch mask (precomputed)

    # softmax: no max-subtraction (scores are small/bounded; masked cols -> exp()==0)
    p = jnp.exp(scores)
    p_b = p.astype(bf16)

    ctx_un = jnp.dot(p_b, v_bd, preferred_element_type=f32)     # (32, 64) 'b n (h g) d'
    denom = jnp.dot(p_b, m2, preferred_element_type=f32)        # per-head sums, bcast over d
    ctx = ctx_un * pl.reciprocal(denom, approx=True)            # EUP slot

    # ------------- out-projection + residual -------------
    h1 = x + jnp.dot(ctx.astype(bf16), wo_ref[...], preferred_element_type=f32)

    # ---------------- RMSNorm (post_attention_layernorm) ----------------
    h1n = h1 * jax.lax.rsqrt(jnp.mean(h1 * h1, axis=-1, keepdims=True) + RMS_EPS)
    h1n = h1n * g2_ref[...]

    # ------------- Fused SwiGLU feed-forward -------------
    gu = jnp.dot(h1n.astype(bf16), wgu_ref[...], preferred_element_type=f32)  # (32, 256)
    gate = gu[:, :FF]                 # split exactly at the 128-lane tile boundary
    up = gu[:, FF:]
    act = gate * jax.nn.sigmoid(gate) * up                                    # silu * up
    ff = jnp.dot(act.astype(bf16), w2_ref[...], preferred_element_type=f32)

    o_ref[...] = h1 + ff                                                      # residual 2


def causal_transformer_layer(x, fused):
    """x: (B, S, D) float32.  fused: dict from prepare_fused_params()."""
    x2 = x.reshape(BS, D)
    full = lambda shape: pl.BlockSpec(shape, lambda i: (0, 0))

    out = pl.pallas_call(
        _layer_kernel,
        out_shape=jax.ShapeDtypeStruct((BS, D), jnp.float32),
        grid=(1,),                      # single invocation (one TC); B folded into M
        in_specs=[
            full((BS, D)),              # x (flattened batch*seq)                f32
            full((1, D)),               # input_layernorm weight                 f32
            full((D, 3 * D)),           # fused [wq/scale | wk dup | wv dup]     bf16
            full((1, 3 * D)),           # fused bias                             f32
            full((D, D)),               # out_proj weight^T                      bf16
            full((1, D)),               # post_attention_layernorm weight        f32
            full((D, 2 * FF)),          # fused [gate | ff1] weight^T            bf16
            full((FF, D)),              # ff2 weight^T                           bf16
            full((WC, D)),              # block-diag head mask / denom matrix    bf16
            full((BS, WC)),             # ALiBi + cross-batch mask bias          f32
        ],
        out_specs=full((BS, D)),
        compiler_params=pltpu.CompilerParams(
            dimension_semantics=("arbitrary",)),
    )(x2, fused["g1"], fused["wqkv_t"], fused["bqkv"], fused["wo_t"],
      fused["g2"], fused["wgu_t"], fused["w2_t"], fused["m2"], fused["bias"])
    return out.reshape(B, S, D)


# ---------------------------------------------------------------------------
# One-time parameter preparation (outside the hot path).
# ---------------------------------------------------------------------------
def prepare_fused_params(p):
    bf = jnp.bfloat16

    # Duplicate k/v projection columns per query head: head qh reads kv head qh // G.
    dup = jnp.concatenate([jnp.arange(HD) + (q // G) * HD for q in range(HQ)])   # (D,)
    wqkv = jnp.concatenate(
        [p["wq_t"] / SCALE, p["wk_t"][:, dup], p["wv_t"][:, dup]], axis=1)       # (D, 3D)
    bqkv = jnp.concatenate(
        [p["bq"] / SCALE, p["bk"][:, dup], p["bv"][:, dup]], axis=1)             # (1, 3D)

    # Block-diagonal head mask / softmax-denominator matrix (WC, D):
    #   rows rho = qh*B*S + b_k*S + s_k ; cols j = qh'*HD + d ; 1 iff qh == qh'.
    rho = jnp.arange(WC)
    col = jnp.arange(D)
    m2 = (rho[:, None] // (B * S) == col[None, :] // HD).astype(jnp.float32)

    # ALiBi bias + cross-batch mask in the wide (r, rho) score layout (BS, WC).
    r = jnp.arange(BS)
    b_q = r[:, None] // S
    s_q = r[:, None] % S
    qh = rho[None, :] // (B * S)
    b_k = (rho[None, :] // S) % B
    s_k = rho[None, :] % S
    slopes = 2.0 ** (-(qh % G).astype(jnp.float32) / G)           # 2^(-g/G), g = qh % G
    alibi = slopes * (-jnp.abs((s_q - s_k).astype(jnp.float32)))
    bias = jnp.where(b_q == b_k, alibi, NEG).astype(jnp.float32)

    return {
        "g1": p["g1"],
        "g2": p["g2"],
        "wqkv_t": wqkv.astype(bf),
        "bqkv": bqkv,
        "wo_t": p["wo_t"].astype(bf),
        "wgu_t": jnp.concatenate([p["wg_t"], p["w1_t"]], axis=1).astype(bf),
        "w2_t": p["w2_t"].astype(bf),
        "m2": m2.astype(bf),
        "bias": bias,
    }


# ---------------------------------------------------------------------------
# Pure-JAX f32 reference (mirrors the PyTorch forward exactly) for validation.
# ---------------------------------------------------------------------------
def _ref_layer(x, p):
    def rms(h, g):
        return h * jax.lax.rsqrt(jnp.mean(h * h, -1, keepdims=True) + RMS_EPS) * g

    xn = rms(x, p["g1"][0])
    q = xn @ p["wq_t"] + p["bq"][0]
    k = xn @ p["wk_t"] + p["bk"][0]
    v = xn @ p["wv_t"] + p["bv"][0]

    q = q.reshape(B, S, HQ, HD).transpose(0, 2, 1, 3) / SCALE              # (B,HQ,S,HD)
    k = k.reshape(B, S, HKV, HD).transpose(0, 2, 1, 3)                     # (B,HKV,S,HD)
    v = v.reshape(B, S, HKV, HD).transpose(0, 2, 1, 3)

    q5 = q.reshape(B, HKV, G, S, HD)                                       # (b,h,g,n,d)
    sim = jnp.einsum("bhgnd,bhsd->bhgns", q5, k)

    ii = jnp.arange(S, dtype=jnp.float32)
    rel = -jnp.abs(ii[None, :] - ii[:, None])
    slopes = jnp.array([2.0 ** (-i / G) for i in range(G)], jnp.float32)
    sim = sim + slopes[None, None, :, None, None] * rel[None, None, None]

    attn = jax.nn.softmax(sim, axis=-1)
    out5 = jnp.einsum("bhgns,bhsd->bhgnd", attn, v)                        # (b,h,g,n,d)
    out = out5.transpose(0, 3, 1, 2, 4).reshape(B, S, D)                   # 'b n (h g) d'
    h1 = x + out @ p["wo_t"]

    h1n = rms(h1, p["g2"][0])
    gate = h1n @ p["wg_t"]
    up = h1n @ p["w1_t"]
    return h1 + (jax.nn.silu(gate) * up) @ p["w2_t"]


def _init_params(key):
    ks = jax.random.split(key, 12)

    def xavier(k, out_f, in_f):
        std = math.sqrt(2.0 / (in_f + out_f))
        return std * jax.random.normal(k, (out_f, in_f), jnp.float32)

    return {
        "g1": 1.0 + 0.1 * jax.random.normal(ks[0], (1, D), jnp.float32),
        "g2": 1.0 + 0.1 * jax.random.normal(ks[1], (1, D), jnp.float32),
        "wq_t": xavier(ks[2], D, D).T,
        "bq": 0.1 * jax.random.normal(ks[3], (1, D), jnp.float32),
        "wk_t": xavier(ks[4], DKV, D).T,
        "bk": 0.1 * jax.random.normal(ks[5], (1, DKV), jnp.float32),
        "wv_t": xavier(ks[6], DKV, D).T,
        "bv": 0.1 * jax.random.normal(ks[7], (1, DKV), jnp.float32),
        "wo_t": xavier(ks[8], D, D).T,
        "wg_t": xavier(ks[9], FF, D).T,
        "w1_t": xavier(ks[10], FF, D).T,
        "w2_t": xavier(ks[11], D, FF).T,
    }


if __name__ == "__main__":
    key = jax.random.PRNGKey(0)
    k_x, k_p = jax.random.split(key)
    x = jax.random.normal(k_x, (B, S, D), jnp.float32)

    params = _init_params(k_p)
    fused = prepare_fused_params(params)          # one-time weight prep

    out = causal_transformer_layer(x, fused)
    out = jax.block_until_ready(out)

    ref = _ref_layer(x, params)
    assert out.shape == (B, S, D)
    max_err = float(jnp.max(jnp.abs(out - ref)))
    # Matmul operands are bf16 (per perf review) with f32 accumulation, so parity
    # vs. the pure-f32 reference is checked at a bf16-appropriate tolerance.
    assert jnp.allclose(out, ref, rtol=5e-2, atol=5e-2), max_err

    print("KERNEL_OK")
</pallas_src>

<mosaic_0001>
module attributes {stable_mosaic.version = 11 : i64} {
  func.func @_layer_kernel(%arg0: i32, %arg1: memref<32x64xf32, #tpu.memory_space<vmem>>, %arg2: memref<1x64xf32, #tpu.memory_space<vmem>>, %arg3: memref<64x192xbf16, #tpu.memory_space<vmem>>, %arg4: memref<1x192xf32, #tpu.memory_space<vmem>>, %arg5: memref<64x64xbf16, #tpu.memory_space<vmem>>, %arg6: memref<1x64xf32, #tpu.memory_space<vmem>>, %arg7: memref<64x256xbf16, #tpu.memory_space<vmem>>, %arg8: memref<128x64xbf16, #tpu.memory_space<vmem>>, %arg9: memref<128x64xbf16, #tpu.memory_space<vmem>>, %arg10: memref<32x128xf32, #tpu.memory_space<vmem>>, %arg11: memref<32x64xf32, #tpu.memory_space<vmem>>) attributes {dimension_semantics = [#tpu.dimension_semantics<arbitrary>], iteration_bounds = array<i64: 1>, scalar_prefetch = 0 : i64, scratch_operands = 0 : i64, tpu.core_type = #tpu.core_type<tc>, window_params = [{pipeline_mode = #tpu.pipeline_mode<synchronous>, transform_indices = @transform_0, window_bounds = array<i64: 32, 64>}, {pipeline_mode = #tpu.pipeline_mode<synchronous>, transform_indices = @transform_1, window_bounds = array<i64: 1, 64>}, {pipeline_mode = #tpu.pipeline_mode<synchronous>, transform_indices = @transform_2, window_bounds = array<i64: 64, 192>}, {pipeline_mode = #tpu.pipeline_mode<synchronous>, transform_indices = @transform_3, window_bounds = array<i64: 1, 192>}, {pipeline_mode = #tpu.pipeline_mode<synchronous>, transform_indices = @transform_4, window_bounds = array<i64: 64, 64>}, {pipeline_mode = #tpu.pipeline_mode<synchronous>, transform_indices = @transform_5, window_bounds = array<i64: 1, 64>}, {pipeline_mode = #tpu.pipeline_mode<synchronous>, transform_indices = @transform_6, window_bounds = array<i64: 64, 256>}, {pipeline_mode = #tpu.pipeline_mode<synchronous>, transform_indices = @transform_7, window_bounds = array<i64: 128, 64>}, {pipeline_mode = #tpu.pipeline_mode<synchronous>, transform_indices = @transform_8, window_bounds = array<i64: 128, 64>}, {pipeline_mode = #tpu.pipeline_mode<synchronous>, transform_indices = @transform_9, window_bounds = array<i64: 32, 128>}, {pipeline_mode = #tpu.pipeline_mode<synchronous>, transform_indices = @transform_10, window_bounds = array<i64: 32, 64>}]} {
    %c0 = arith.constant 0 : index
    %c0_0 = arith.constant 0 : index
    %0 = vector.load %arg1[%c0, %c0_0] : memref<32x64xf32, #tpu.memory_space<vmem>>, vector<32x64xf32>
    %1 = arith.mulf %0, %0 : vector<32x64xf32>
    %cst = arith.constant dense<0.000000e+00> : vector<32xf32>
    %2 = vector.multi_reduction <add>, %1, %cst [1] : vector<32x64xf32> to vector<32xf32>
    %3 = vector.shape_cast %2 : vector<32xf32> to vector<32x1xf32>
    %cst_1 = arith.constant 6.400000e+01 : f32
    %4 = vector.broadcast %cst_1 : f32 to vector<32x1xf32>
    %5 = arith.divf %3, %4 : vector<32x1xf32>
    %cst_2 = arith.constant 1.1920929E-7 : f32
    %6 = vector.broadcast %cst_2 : f32 to vector<32x1xf32>
    %7 = arith.addf %5, %6 : vector<32x1xf32>
    %8 = math.rsqrt %7 : vector<32x1xf32>
    %9 = vector.broadcast %8 : vector<32x1xf32> to vector<32x64xf32>
    %10 = arith.mulf %0, %9 : vector<32x64xf32>
    %c0_3 = arith.constant 0 : index
    %c0_4 = arith.constant 0 : index
    %11 = vector.load %arg2[%c0_3, %c0_4] : memref<1x64xf32, #tpu.memory_space<vmem>>, vector<1x64xf32>
    %12 = vector.broadcast %11 : vector<1x64xf32> to vector<32x64xf32>
    %13 = arith.mulf %10, %12 : vector<32x64xf32>
    %14 = arith.truncf %13 : vector<32x64xf32> to vector<32x64xbf16>
    %c0_5 = arith.constant 0 : index
    %c0_6 = arith.constant 0 : index
    %15 = vector.load %arg3[%c0_5, %c0_6] : memref<64x192xbf16, #tpu.memory_space<vmem>>, vector<64x192xbf16>
    %cst_7 = arith.constant dense<0.000000e+00> : vector<32x192xf32>
    %16 = tpu.matmul %14, %15, %cst_7 {dimension_numbers = #tpu.dot_dimension_numbers<[1], [0], [0], [1], [0, 0, 1, 1], [], []>} : vector<32x64xbf16>, vector<64x192xbf16>, vector<32x192xf32> -> vector<32x192xf32>
    %c0_8 = arith.constant 0 : index
    %c0_9 = arith.constant 0 : index
    %17 = vector.load %arg4[%c0_8, %c0_9] : memref<1x192xf32, #tpu.memory_space<vmem>>, vector<1x192xf32>
    %18 = vector.broadcast %17 : vector<1x192xf32> to vector<32x192xf32>
    %19 = arith.addf %16, %18 : vector<32x192xf32>
    %20 = vector.extract_strided_slice %19 {offsets = [0, 0], sizes = [32, 64], strides = [1, 1]} : vector<32x192xf32> to vector<32x64xf32>
    %21 = arith.truncf %20 : vector<32x64xf32> to vector<32x64xbf16>
    %22 = vector.extract_strided_slice %19 {offsets = [0, 64], sizes = [32, 64], strides = [1, 1]} : vector<32x192xf32> to vector<32x64xf32>
    %23 = vector.extract_strided_slice %19 {offsets = [0, 128], sizes = [32, 64], strides = [1, 1]} : vector<32x192xf32> to vector<32x64xf32>
    %c0_10 = arith.constant 0 : index
    %c0_11 = arith.constant 0 : index
    %24 = vector.load %arg9[%c0_10, %c0_11] : memref<128x64xbf16, #tpu.memory_space<vmem>>, vector<128x64xbf16>
    %25 = arith.extf %24 : vector<128x64xbf16> to vector<128x64xf32>
    %26 = tpu.concatenate %22, %22, %22, %22 in 0 : vector<32x64xf32>, vector<32x64xf32>, vector<32x64xf32>, vector<32x64xf32> -> vector<128x64xf32>
    %27 = arith.mulf %26, %25 : vector<128x64xf32>
    %28 = arith.truncf %27 : vector<128x64xf32> to vector<128x64xbf16>
    %29 = tpu.concatenate %23, %23, %23, %23 in 0 : vector<32x64xf32>, vector<32x64xf32>, vector<32x64xf32>, vector<32x64xf32> -> vector<128x64xf32>
    %30 = arith.mulf %29, %25 : vector<128x64xf32>
    %31 = arith.truncf %30 : vector<128x64xf32> to vector<128x64xbf16>
    %cst_12 = arith.constant dense<0.000000e+00> : vector<32x128xf32>
    %32 = tpu.matmul %21, %28, %cst_12 {dimension_numbers = #tpu.dot_dimension_numbers<[1], [1], [0], [0], [0, 0, 1, 0], [], []>} : vector<32x64xbf16>, vector<128x64xbf16>, vector<32x128xf32> -> vector<32x128xf32>
    %c0_13 = arith.constant 0 : index
    %c0_14 = arith.constant 0 : index
    %33 = vector.load %arg10[%c0_13, %c0_14] : memref<32x128xf32, #tpu.memory_space<vmem>>, vector<32x128xf32>
    %34 = arith.addf %32, %33 : vector<32x128xf32>
    %35 = math.exp %34 : vector<32x128xf32>
    %36 = arith.truncf %35 : vector<32x128xf32> to vector<32x128xbf16>
    %cst_15 = arith.constant dense<0.000000e+00> : vector<32x64xf32>
    %37 = tpu.matmul %36, %31, %cst_15 {dimension_numbers = #tpu.dot_dimension_numbers<[1], [0], [0], [1], [0, 0, 1, 1], [], []>} : vector<32x128xbf16>, vector<128x64xbf16>, vector<32x64xf32> -> vector<32x64xf32>
    %cst_16 = arith.constant dense<0.000000e+00> : vector<32x64xf32>
    %38 = tpu.matmul %36, %24, %cst_16 {dimension_numbers = #tpu.dot_dimension_numbers<[1], [0], [0], [1], [0, 0, 1, 1], [], []>} : vector<32x128xbf16>, vector<128x64xbf16>, vector<32x64xf32> -> vector<32x64xf32>
    %39 = tpu.reciprocal %38 {approx = true} : vector<32x64xf32> -> vector<32x64xf32>
    %40 = arith.mulf %37, %39 : vector<32x64xf32>
    %41 = arith.truncf %40 : vector<32x64xf32> to vector<32x64xbf16>
    %c0_17 = arith.constant 0 : index
    %c0_18 = arith.constant 0 : index
    %42 = vector.load %arg5[%c0_17, %c0_18] : memref<64x64xbf16, #tpu.memory_space<vmem>>, vector<64x64xbf16>
    %cst_19 = arith.constant dense<0.000000e+00> : vector<32x64xf32>
    %43 = tpu.matmul %41, %42, %cst_19 {dimension_numbers = #tpu.dot_dimension_numbers<[1], [0], [0], [1], [0, 0, 1, 1], [], []>} : vector<32x64xbf16>, vector<64x64xbf16>, vector<32x64xf32> -> vector<32x64xf32>
    %44 = arith.addf %0, %43 : vector<32x64xf32>
    %45 = arith.mulf %44, %44 : vector<32x64xf32>
    %cst_20 = arith.constant dense<0.000000e+00> : vector<32xf32>
    %46 = vector.multi_reduction <add>, %45, %cst_20 [1] : vector<32x64xf32> to vector<32xf32>
    %47 = vector.shape_cast %46 : vector<32xf32> to vector<32x1xf32>
    %cst_21 = arith.constant 6.400000e+01 : f32
    %48 = vector.broadcast %cst_21 : f32 to vector<32x1xf32>
    %49 = arith.divf %47, %48 : vector<32x1xf32>
    %cst_22 = arith.constant 1.1920929E-7 : f32
    %50 = vector.broadcast %cst_22 : f32 to vector<32x1xf32>
    %51 = arith.addf %49, %50 : vector<32x1xf32>
    %52 = math.rsqrt %51 : vector<32x1xf32>
    %53 = vector.broadcast %52 : vector<32x1xf32> to vector<32x64xf32>
    %54 = arith.mulf %44, %53 : vector<32x64xf32>
    %c0_23 = arith.constant 0 : index
    %c0_24 = arith.constant 0 : index
    %55 = vector.load %arg6[%c0_23, %c0_24] : memref<1x64xf32, #tpu.memory_space<vmem>>, vector<1x64xf32>
    %56 = vector.broadcast %55 : vector<1x64xf32> to vector<32x64xf32>
    %57 = arith.mulf %54, %56 : vector<32x64xf32>
    %58 = arith.truncf %57 : vector<32x64xf32> to vector<32x64xbf16>
    %c0_25 = arith.constant 0 : index
    %c0_26 = arith.constant 0 : index
    %59 = vector.load %arg7[%c0_25, %c0_26] : memref<64x256xbf16, #tpu.memory_space<vmem>>, vector<64x256xbf16>
    %cst_27 = arith.constant dense<0.000000e+00> : vector<32x256xf32>
    %60 = tpu.matmul %58, %59, %cst_27 {dimension_numbers = #tpu.dot_dimension_numbers<[1], [0], [0], [1], [0, 0, 1, 1], [], []>} : vector<32x64xbf16>, vector<64x256xbf16>, vector<32x256xf32> -> vector<32x256xf32>
    %61 = vector.extract_strided_slice %60 {offsets = [0, 0], sizes = [32, 128], strides = [1, 1]} : vector<32x256xf32> to vector<32x128xf32>
    %62 = vector.extract_strided_slice %60 {offsets = [0, 128], sizes = [32, 128], strides = [1, 1]} : vector<32x256xf32> to vector<32x128xf32>
    %63 = arith.negf %61 : vector<32x128xf32>
    %64 = math.exp %63 : vector<32x128xf32>
    %cst_28 = arith.constant 1.000000e+00 : f32
    %65 = vector.broadcast %cst_28 : f32 to vector<32x128xf32>
    %66 = arith.addf %65, %64 : vector<32x128xf32>
    %67 = arith.divf %65, %66 : vector<32x128xf32>
    %68 = arith.mulf %61, %67 : vector<32x128xf32>
    %69 = arith.mulf %68, %62 : vector<32x128xf32>
    %70 = arith.truncf %69 : vector<32x128xf32> to vector<32x128xbf16>
    %c0_29 = arith.constant 0 : index
    %c0_30 = arith.constant 0 : index
    %71 = vector.load %arg8[%c0_29, %c0_30] : memref<128x64xbf16, #tpu.memory_space<vmem>>, vector<128x64xbf16>
    %cst_31 = arith.constant dense<0.000000e+00> : vector<32x64xf32>
    %72 = tpu.matmul %70, %71, %cst_31 {dimension_numbers = #tpu.dot_dimension_numbers<[1], [0], [0], [1], [0, 0, 1, 1], [], []>} : vector<32x128xbf16>, vector<128x64xbf16>, vector<32x64xf32> -> vector<32x64xf32>
    %73 = arith.addf %44, %72 : vector<32x64xf32>
    %c0_32 = arith.constant 0 : index
    %c0_33 = arith.constant 0 : index
    %74 = vector.load %arg11[%c0_32, %c0_33] : memref<32x64xf32, #tpu.memory_space<vmem>>, vector<32x64xf32>
    tpu.vector_store %arg11[%c0_32, %c0_33], %73 {strides = array<i32>} : memref<32x64xf32, #tpu.memory_space<vmem>>, vector<32x64xf32>,
    return
  }
  func.func @transform_0(%arg0: i32) -> (i32, i32) {
    %c0_i32 = arith.constant 0 : i32
    %c0_i32_0 = arith.constant 0 : i32
    %c0_i32_1 = arith.constant 0 : i32
    return %c0_i32, %c0_i32_0 : i32, i32
  }
  func.func @transform_1(%arg0: i32) -> (i32, i32) {
    %c0_i32 = arith.constant 0 : i32
    %c0_i32_0 = arith.constant 0 : i32
    %c0_i32_1 = arith.constant 0 : i32
    return %c0_i32, %c0_i32_0 : i32, i32
  }
  func.func @transform_2(%arg0: i32) -> (i32, i32) {
    %c0_i32 = arith.constant 0 : i32
    %c0_i32_0 = arith.constant 0 : i32
    %c0_i32_1 = arith.constant 0 : i32
    return %c0_i32, %c0_i32_0 : i32, i32
  }
  func.func @transform_3(%arg0: i32) -> (i32, i32) {
    %c0_i32 = arith.constant 0 : i32
    %c0_i32_0 = arith.constant 0 : i32
    %c0_i32_1 = arith.constant 0 : i32
    return %c0_i32, %c0_i32_0 : i32, i32
  }
  func.func @transform_4(%arg0: i32) -> (i32, i32) {
    %c0_i32 = arith.constant 0 : i32
    %c0_i32_0 = arith.constant 0 : i32
    %c0_i32_1 = arith.constant 0 : i32
    return %c0_i32, %c0_i32_0 : i32, i32
  }
  func.func @transform_5(%arg0: i32) -> (i32, i32) {
    %c0_i32 = arith.constant 0 : i32
    %c0_i32_0 = arith.constant 0 : i32
    %c0_i32_1 = arith.constant 0 : i32
    return %c0_i32, %c0_i32_0 : i32, i32
  }
  func.func @transform_6(%arg0: i32) -> (i32, i32) {
    %c0_i32 = arith.constant 0 : i32
    %c0_i32_0 = arith.constant 0 : i32
    %c0_i32_1 = arith.constant 0 : i32
    return %c0_i32, %c0_i32_0 : i32, i32
  }
  func.func @transform_7(%arg0: i32) -> (i32, i32) {
    %c0_i32 = arith.constant 0 : i32
    %c0_i32_0 = arith.constant 0 : i32
    %c0_i32_1 = arith.constant 0 : i32
    return %c0_i32, %c0_i32_0 : i32, i32
  }
  func.func @transform_8(%arg0: i32) -> (i32, i32) {
    %c0_i32 = arith.constant 0 : i32
    %c0_i32_0 = arith.constant 0 : i32
    %c0_i32_1 = arith.constant 0 : i32
    return %c0_i32, %c0_i32_0 : i32, i32
  }
  func.func @transform_9(%arg0: i32) -> (i32, i32) {
    %c0_i32 = arith.constant 0 : i32
    %c0_i32_0 = arith.constant 0 : i32
    %c0_i32_1 = arith.constant 0 : i32
    return %c0_i32, %c0_i32_0 : i32, i32
  }
  func.func @transform_10(%arg0: i32) -> (i32, i32) {
    %c0_i32 = arith.constant 0 : i32
    %c0_i32_0 = arith.constant 0 : i32
    %c0_i32_1 = arith.constant 0 : i32
    return %c0_i32, %c0_i32_0 : i32, i32
  }
}

</mosaic_0001>

<llo_original>
// kernel: tpu_custom_call.1
$region0: #{tpu_custom_call.1}
  #allocation0 [shape = 'u32[]', space=smem, size = 0x4, offset = 0x4, fixed_abs, tag = 'smem constant byte address 0x4 - core index']
  #allocation1 [shape = 'u32[144,128]{1,0:T(1,128)}', space=vmem, size = 0x12000, scoped, tag = 'internal scratch']
  %s0 = inlined_call_operand.vmem [shape: f32[32,64], index: 0, kind: input, shape index: {}]
  %s1 = inlined_call_operand.hbm [shape: f32[1,64], index: 1, kind: input, shape index: {}]
  %s2 = inlined_call_operand.vmem [shape: bf16[64,192], index: 2, kind: input, shape index: {}]
  %s3 = inlined_call_operand.vmem [shape: f32[1,192], index: 3, kind: input, shape index: {}]
  %s4 = inlined_call_operand.hbm [shape: bf16[64,64], index: 4, kind: input, shape index: {}]
  %s5 = inlined_call_operand.hbm [shape: f32[1,64], index: 5, kind: input, shape index: {}]
  %s6 = inlined_call_operand.vmem [shape: bf16[64,256], index: 6, kind: input, shape index: {}]
  %s7 = inlined_call_operand.vmem [shape: bf16[128,64], index: 7, kind: input, shape index: {}]
  %s8 = inlined_call_operand.vmem [shape: bf16[128,64], index: 8, kind: input, shape index: {}]
  %s9 = inlined_call_operand.vmem [shape: f32[32,128], index: 9, kind: input, shape index: {}]
  %s10 = inlined_call_operand.hbm [shape: f32[32,64], index: 10, kind: output, shape index: {}]
  %s11 = sld [smem:[#allocation0]]
  $region62: #{tpu_custom_call.1} parent=0
    _
  %s13 = ssub.s32 1, %s11
  %s14 = scalar_select 0, %s13, %s11
  $region1: #{tpu_custom_call.1} parent=0
    #allocation2 [shape = 'u8[512]{0}', space=vmem, size = 0x400, scoped, tag = 'input window, operand 1, single buffered']
    #allocation3 [shape = 's32[1]{0}', space=sflag, size = 0x4, scoped, tag = 'scoped memory for tpu_custom_call.1']
    #allocation4 [shape = 's32[1]{0}', space=sflag, size = 0x4, scoped, tag = 'scoped memory for tpu_custom_call.1']
    #allocation5 [shape = 'u8[16384]{0}', space=vmem, size = 0x4000, scoped, tag = 'input window, operand 4, single buffered']
    #allocation6 [shape = 's32[1]{0}', space=sflag, size = 0x4, scoped, tag = 'scoped memory for tpu_custom_call.1']
    #allocation7 [shape = 'u8[512]{0}', space=vmem, size = 0x400, scoped, tag = 'input window, operand 5, single buffered']
    #allocation8 [shape = 'u8[16384]{0}', space=vmem, size = 0x4000, scoped, tag = 'output window, operand 0, single buffered']
    %15 = vsyncpa [#allocation3], 0
    %16 = vsyncpa [#allocation6], 0
    %17 = vsyncpa [#allocation4], 0
    // Predicated region
    $region2: #{tpu_custom_call.1} parent=1 // pred_check
      _
    $region3: #{tpu_custom_call.1} parent=1 // pred_check_branch
      %19 = sbr.rel (0) target = $region5
    $region4: #{tpu_custom_call.1} parent=1 // pred_region
      _
    $region5: #{tpu_custom_call.1} parent=1 // pred_fallthru
      _
    // Predicated region
    $region6: #{tpu_custom_call.1} parent=1 // pred_check
      _
    $region7: #{tpu_custom_call.1} parent=1 // pred_check_branch
      %21 = sbr.rel (0) target = $region9
    $region8: #{tpu_custom_call.1} parent=1 // pred_region
      %s23 = ssub.s32 16, 16
      %24 = vsyncadd [#allocation3], %s23
      %s26 = sshll.u32 [#allocation2], 4
      %s27 = int_to_ptr.vmem [resolvable:$true] %s26
      %29 = dma.hbm_to_vmem [thread:$0]  %s1, 16, %s27, [#allocation3]
    $region9: #{tpu_custom_call.1} parent=1 // pred_fallthru
      _
    // Predicated region
    $region10: #{tpu_custom_call.1} parent=1 // pred_check
      _
    $region11: #{tpu_custom_call.1} parent=1 // pred_check_branch
      %31 = sbr.rel (0) target = $region13
    $region12: #{tpu_custom_call.1} parent=1 // pred_region
      _
    $region13: #{tpu_custom_call.1} parent=1 // pred_fallthru
      _
    // Predicated region
    $region14: #{tpu_custom_call.1} parent=1 // pred_check
      _
    $region15: #{tpu_custom_call.1} parent=1 // pred_check_branch
      %33 = sbr.rel (0) target = $region17
    $region16: #{tpu_custom_call.1} parent=1 // pred_region
      _
    $region17: #{tpu_custom_call.1} parent=1 // pred_fallthru
      _
    // Predicated region
    $region18: #{tpu_custom_call.1} parent=1 // pred_check
      _
    $region19: #{tpu_custom_call.1} parent=1 // pred_check_branch
      %35 = sbr.rel (0) target = $region21
    $region20: #{tpu_custom_call.1} parent=1 // pred_region
      %s37 = ssub.s32 512, 512
      %38 = vsyncadd [#allocation6], %s37
      %s39 = sshll.u32 [#allocation5], 4
      %s40 = int_to_ptr.vmem [resolvable:$true] %s39
      %45 = dma.hbm_to_vmem [thread:$0]  %s4, 512, %s40, [#allocation6], 64, 64, 4
    $region21: #{tpu_custom_call.1} parent=1 // pred_fallthru
      _
    // Predicated region
    $region22: #{tpu_custom_call.1} parent=1 // pred_check
      _
    $region23: #{tpu_custom_call.1} parent=1 // pred_check_branch
      %47 = sbr.rel (0) target = $region25
    $region24: #{tpu_custom_call.1} parent=1 // pred_region
      %s49 = ssub.s32 16, 16
      %50 = vsyncadd [#allocation6], %s49
      %s52 = sshll.u32 [#allocation7], 4
      %s53 = int_to_ptr.vmem [resolvable:$true] %s52
      %55 = dma.hbm_to_vmem [thread:$0]  %s5, 16, %s53, [#allocation6]
    $region25: #{tpu_custom_call.1} parent=1 // pred_fallthru
      _
    // Predicated region
    $region26: #{tpu_custom_call.1} parent=1 // pred_check
      _
    $region27: #{tpu_custom_call.1} parent=1 // pred_check_branch
      %57 = sbr.rel (0) target = $region29
    $region28: #{tpu_custom_call.1} parent=1 // pred_region
      _
    $region29: #{tpu_custom_call.1} parent=1 // pred_fallthru
      _
    // Predicated region
    $region30: #{tpu_custom_call.1} parent=1 // pred_check
      _
    $region31: #{tpu_custom_call.1} parent=1 // pred_check_branch
      %59 = sbr.rel (0) target = $region33
    $region32: #{tpu_custom_call.1} parent=1 // pred_region
      _
    $region33: #{tpu_custom_call.1} parent=1 // pred_fallthru
      _
    // Predicated region
    $region34: #{tpu_custom_call.1} parent=1 // pred_check
      _
    $region35: #{tpu_custom_call.1} parent=1 // pred_check_branch
      %61 = sbr.rel (0) target = $region37
    $region36: #{tpu_custom_call.1} parent=1 // pred_region
      _
    $region37: #{tpu_custom_call.1} parent=1 // pred_fallthru
      _
    // Predicated region
    $region38: #{tpu_custom_call.1} parent=1 // pred_check
      _
    $region39: #{tpu_custom_call.1} parent=1 // pred_check_branch
      %63 = sbr.rel (0) target = $region41
    $region40: #{tpu_custom_call.1} parent=1 // pred_region
      _
    $region41: #{tpu_custom_call.1} parent=1 // pred_fallthru
      _
    // Predicated region
    $region42: #{tpu_custom_call.1} parent=1 // pred_check
      _
    $region43: #{tpu_custom_call.1} parent=1 // pred_check_branch
      %65 = sbr.rel (0) target = $region45
    $region44: #{tpu_custom_call.1} parent=1 // pred_region
      %66 = dma.done [#allocation3], 16
    $region45: #{tpu_custom_call.1} parent=1 // pred_fallthru
      _
    // Predicated region
    $region46: #{tpu_custom_call.1} parent=1 // pred_check
      _
    $region47: #{tpu_custom_call.1} parent=1 // pred_check_branch
      %68 = sbr.rel (0) target = $region49
    $region48: #{tpu_custom_call.1} parent=1 // pred_region
      %69 = dma.done [#allocation6], 512
    $region49: #{tpu_custom_call.1} parent=1 // pred_fallthru
      _
    // Predicated region
    $region50: #{tpu_custom_call.1} parent=1 // pred_check
      _
    $region51: #{tpu_custom_call.1} parent=1 // pred_check_branch
      %71 = sbr.rel (0) target = $region53
    $region52: #{tpu_custom_call.1} parent=1 // pred_region
      %72 = dma.done [#allocation6], 16
    $region53: #{tpu_custom_call.1} parent=1 // pred_fallthru
      _
    %v74 = vld [vmem:[%s0] sm:$0xff]
    %v75 = vld [vmem:[%s0 + $0x8] sm:$0xff]
    %v76 = vld [vmem:[%s0 + $0x10] sm:$0xff]
    %v77 = vld [vmem:[%s0 + $0x18] sm:$0xff]
    %v78 = vmul.f32 %v74, %v74
    %v79 = vmul.f32 %v75, %v75
    %v80 = vmul.f32 %v76, %v76
    %v81 = vmul.f32 %v77, %v77
    %vm82 = vcmask 523264
    %v83 = vsel %vm82, %v78, 0.0
    %84 = vadd.xlane.f32.xlu0 %v83
    %v85 = vpop.xlane.xlu0 %84
    %v86 = vsel %vm82, %v79, 0.0
    %87 = vadd.xlane.f32.xlu0 %v86
    %v88 = vpop.xlane.xlu0 %87
    %v89 = vsel %vm82, %v80, 0.0
    %90 = vadd.xlane.f32.xlu0 %v89
    %v91 = vpop.xlane.xlu0 %90
    %v92 = vsel %vm82, %v81, 0.0
    %93 = vadd.xlane.f32.xlu0 %v92
    %v94 = vpop.xlane.xlu0 %93
    %v95 = vrcp.pop 64.0
    %v96 = vmul.f32 %v85, %v95
    %v97 = vmul.f32 %v88, %v95
    %v98 = vmul.f32 %v91, %v95
    %v99 = vmul.f32 %v94, %v95
    %v100 = vadd.f32 %v96, 1.1920929e-07
    %v101 = vadd.f32 %v97, 1.1920929e-07
    %v102 = vadd.f32 %v98, 1.1920929e-07
    %v103 = vadd.f32 %v99, 1.1920929e-07
    %v104 = vrsqrt.pop %v100
    %v105 = vrsqrt.pop %v101
    %v106 = vrsqrt.pop %v102
    %v107 = vrsqrt.pop %v103
    %v108 = vmul.f32 %v74, %v104
    %v109 = vmul.f32 %v75, %v105
    %v110 = vmul.f32 %v76, %v106
    %v111 = vmul.f32 %v77, %v107
    %v112 = vld [vmem:[#allocation2] sm:$0x1]
    %v114 = vlaneseq
    %v115 = vshrl.u32 %v114, 7
    %v116 = vsub.s32 0, %v115
    %v117 = vrot.slane %v112, %v116
    %v119 = vmul.f32 %v108, %v117
    %v120 = vmul.f32 %v109, %v117
    %v121 = vmul.f32 %v110, %v117
    %v122 = vmul.f32 %v111, %v117
    %v123 = vpack.c.bf16 %v120, %v119
    %v124 = vpack.c.bf16 %v122, %v121
    %v125 = vld [vmem:[%s2] sm:$0xff]
    %v126 = vld [vmem:[%s2 + $0x8] sm:$0xff]
    %v127 = vld [vmem:[%s2 + $0x10] sm:$0xff]
    %v128 = vld [vmem:[%s2 + $0x18] sm:$0xff]
    %v129 = vld [vmem:[%s2 + $0x20] sm:$0xff]
    %v130 = vld [vmem:[%s2 + $0x28] sm:$0xff]
    %v131 = vld [vmem:[%s2 + $0x30] sm:$0xff]
    %v132 = vld [vmem:[%s2 + $0x38] sm:$0xff]
    %v133 = vld [vmem:[%s3] sm:$0x3]
    %v135 = vlaneseq
    %v136 = vshrl.u32 %v135, 7
    %v137 = vsub.s32 0, %v136
    %v138 = vrot.slane %v133, %v137
    %v139 = vlaneseq
    %v140 = vshrl.u32 %v139, 7
    %v141 = vsub.s32 1, %v140
    %v142 = vrot.slane %v133, %v141
    %v153 = vunpack.c.l.b16 %v125
    %v154 = vunpack.c.h.b16 %v125
    %v155 = vunpack.c.l.b16 %v126
    %v156 = vunpack.c.h.b16 %v126
    %v157 = vunpack.c.l.b16 %v127
    %v158 = vunpack.c.h.b16 %v127
    %v159 = vunpack.c.l.b16 %v128
    %v160 = vunpack.c.h.b16 %v128
    %v161 = vunpack.c.l.b16 %v129
    %v162 = vunpack.c.h.b16 %v129
    %v163 = vunpack.c.l.b16 %v130
    %v164 = vunpack.c.h.b16 %v130
    %v165 = vunpack.c.l.b16 %v131
    %v166 = vunpack.c.h.b16 %v131
    %v167 = vunpack.c.l.b16 %v132
    %v168 = vunpack.c.h.b16 %v132
    %v169 = vpack.c.b16 %v155, %v153
    %v170 = vpack.c.b16 %v156, %v154
    %v171 = vpack.c.b16 %v159, %v157
    %v172 = vpack.c.b16 %v160, %v158
    %v173 = vpack.c.b16 %v163, %v161
    %v174 = vpack.c.b16 %v164, %v162
    %v175 = vpack.c.b16 %v167, %v165
    %v176 = vpack.c.b16 %v168, %v166
    %v186 = vsel %vm82, %v123, 0
    %v189 = vsel %vm82, %v124, 0
    %191 = vmatprep.subr.bf16.mxu0 %v170
    %192 = vmatpush1.bf16.msra.mxu0 %v169
    %193 = vmatprep.subr.bf16.mxu0 %v172
    %194 = vmatpush1.bf16.msra.mxu0 %v171
    %195 = vmatprep.subr.bf16.mxu0 %v174
    %196 = vmatpush1.bf16.msra.mxu0 %v173
    %197 = vmatprep.subr.bf16.mxu0 %v176
    %198 = vmatpush1.bf16.msra.mxu0 %v175
    %199 = vmatprep.subr.bf16.mxu0 0
    %200 = vmatpush1.bf16.msra.mxu0 0
    %201 = vmatprep.subr.bf16.mxu0 0
    %202 = vmatpush1.bf16.msra.mxu0 0
    %203 = vmatprep.subr.bf16.mxu0 0
    %204 = vmatpush1.bf16.msra.mxu0 0
    %205 = vmatprep.subr.bf16.mxu0 0
    %206 = vmatpush1.bf16.msra.mxu0 0
    %207 = vmatprep.subr.bf16.mxu0 0
    %208 = vmatpush1.bf16.msra.mxu0 0
    %209 = vmatprep.subr.bf16.mxu0 0
    %210 = vmatpush1.bf16.msra.mxu0 0
    %211 = vmatprep.subr.bf16.mxu0 0
    %212 = vmatpush1.bf16.msra.mxu0 0
    %213 = vmatprep.subr.bf16.mxu0 0
    %214 = vmatpush1.bf16.msra.mxu0 0
    %215 = vmatprep.subr.bf16.mxu0 0
    %216 = vmatpush1.bf16.msra.mxu0 0
    %217 = vmatprep.subr.bf16.mxu0 0
    %218 = vmatpush1.bf16.msra.mxu0 0
    %219 = vmatprep.subr.bf16.mxu0 0
    %220 = vmatpush1.bf16.msra.mxu0 0
    %221 = vmatprep.subr.bf16.mxu0 0
    %222 = vmatpush1.bf16.msra.mxu0 0
    %223 = vmatprep.mubr.bf16.mxu0 0
    %224 = vmatmul.mubr.bf16.gmra.mrb[0].mxu0 %v186
    %v225 = vpop.f32.mrb[0].mxu0
    %v226 = vadd.f32 %v138, %v225
    %v227 = vpop.f32.mrb[0].mxu0
    %v228 = vadd.f32 %v142, %v227
    %v229 = vpop.f32.mrb[0].mxu0
    %v230 = vadd.f32 %v138, %v229
    %v231 = vpop.f32.mrb[0].mxu0
    %v232 = vadd.f32 %v142, %v231
    %233 = vmatprep.mubr.bf16.mxu0 0
    %234 = vmatmul.mubr.bf16.gmra.mrb[0].mxu0 %v189
    %v235 = vpop.f32.mrb[0].mxu0
    %v236 = vadd.f32 %v138, %v235
    %v237 = vpop.f32.mrb[0].mxu0
    %v238 = vadd.f32 %v142, %v237
    %v239 = vpop.f32.mrb[0].mxu0
    %v240 = vadd.f32 %v138, %v239
    %v241 = vpop.f32.mrb[0].mxu0
    %v242 = vadd.f32 %v142, %v241
    %243 = vdwg.mxu0
    %v244 = vpack.c.bf16 %v230, %v226
    %v245 = vpack.c.bf16 %v240, %v236
    %v246 = vld [vmem:[%s8] sm:$0xf]
    %v247 = vld [vmem:[%s8 + $0x4] sm:$0xf]
    %v248 = vld [vmem:[%s8 + $0x8] sm:$0xf]
    %v249 = vld [vmem:[%s8 + $0xc] sm:$0xf]
    %v250 = vld [vmem:[%s8 + $0x10] sm:$0xf]
    %v251 = vld [vmem:[%s8 + $0x14] sm:$0xf]
    %v252 = vld [vmem:[%s8 + $0x18] sm:$0xf]
    %v253 = vld [vmem:[%s8 + $0x1c] sm:$0xf]
    %v254 = vld [vmem:[%s8 + $0x20] sm:$0xf]
    %v255 = vld [vmem:[%s8 + $0x24] sm:$0xf]
    %v256 = vld [vmem:[%s8 + $0x28] sm:$0xf]
    %v257 = vld [vmem:[%s8 + $0x2c] sm:$0xf]
    %v258 = vld [vmem:[%s8 + $0x30] sm:$0xf]
    %v259 = vld [vmem:[%s8 + $0x34] sm:$0xf]
    %v260 = vld [vmem:[%s8 + $0x38] sm:$0xf]
    %v261 = vld [vmem:[%s8 + $0x3c] sm:$0xf]
    %v262 = vunpack.c.l.bf16 %v246
    %v263 = vunpack.c.l.bf16 %v247
    %v264 = vunpack.c.l.bf16 %v248
    %v265 = vunpack.c.l.bf16 %v249
    %v266 = vunpack.c.l.bf16 %v250
    %v267 = vunpack.c.l.bf16 %v251
    %v268 = vunpack.c.l.bf16 %v252
    %v269 = vunpack.c.l.bf16 %v253
    %v270 = vunpack.c.l.bf16 %v254
    %v271 = vunpack.c.l.bf16 %v255
    %v272 = vunpack.c.l.bf16 %v256
    %v273 = vunpack.c.l.bf16 %v257
    %v274 = vunpack.c.l.bf16 %v258
    %v275 = vunpack.c.l.bf16 %v259
    %v276 = vunpack.c.l.bf16 %v260
    %v277 = vunpack.c.l.bf16 %v261
    %294 = vrot.lane.b32.xlu0 %v262, 64
    %v295 = vpop.permute.xlu0 %294
    %296 = vrot.lane.b32.xlu0 %v263, 64
    %v297 = vpop.permute.xlu0 %296
    %298 = vrot.lane.b32.xlu0 %v264, 64
    %v299 = vpop.permute.xlu0 %298
    %300 = vrot.lane.b32.xlu0 %v265, 64
    %v301 = vpop.permute.xlu0 %300
    %302 = vrot.lane.b32.xlu0 %v266, 64
    %v303 = vpop.permute.xlu0 %302
    %304 = vrot.lane.b32.xlu0 %v267, 64
    %v305 = vpop.permute.xlu0 %304
    %306 = vrot.lane.b32.xlu0 %v268, 64
    %v307 = vpop.permute.xlu0 %306
    %308 = vrot.lane.b32.xlu0 %v269, 64
    %v309 = vpop.permute.xlu0 %308
    %310 = vrot.lane.b32.xlu0 %v270, 64
    %v311 = vpop.permute.xlu0 %310
    %312 = vrot.lane.b32.xlu0 %v271, 64
    %v313 = vpop.permute.xlu0 %312
    %314 = vrot.lane.b32.xlu0 %v272, 64
    %v315 = vpop.permute.xlu0 %314
    %316 = vrot.lane.b32.xlu0 %v273, 64
    %v317 = vpop.permute.xlu0 %316
    %318 = vrot.lane.b32.xlu0 %v274, 64
    %v319 = vpop.permute.xlu0 %318
    %320 = vrot.lane.b32.xlu0 %v275, 64
    %v321 = vpop.permute.xlu0 %320
    %322 = vrot.lane.b32.xlu0 %v276, 64
    %v323 = vpop.permute.xlu0 %322
    %324 = vrot.lane.b32.xlu0 %v277, 64
    %v325 = vpop.permute.xlu0 %324
    %v342 = vmul.f32 %v226, %v295
    %v343 = vmul.f32 %v230, %v297
    %v344 = vmul.f32 %v236, %v299
    %v345 = vmul.f32 %v240, %v301
    %v346 = vmul.f32 %v226, %v303
    %v347 = vmul.f32 %v230, %v305
    %v348 = vmul.f32 %v236, %v307
    %v349 = vmul.f32 %v240, %v309
    %v350 = vmul.f32 %v226, %v311
    %v351 = vmul.f32 %v230, %v313
    %v352 = vmul.f32 %v236, %v315
    %v353 = vmul.f32 %v240, %v317
    %v354 = vmul.f32 %v226, %v319
    %v355 = vmul.f32 %v230, %v321
    %v356 = vmul.f32 %v236, %v323
    %v357 = vmul.f32 %v240, %v325
    %v358 = vpack.c.bf16 %v343, %v342
    %v359 = vpack.c.bf16 %v345, %v344
    %v360 = vpack.c.bf16 %v347, %v346
    %v361 = vpack.c.bf16 %v349, %v348
    %v362 = vpack.c.bf16 %v351, %v350
    %v363 = vpack.c.bf16 %v353, %v352
    %v364 = vpack.c.bf16 %v355, %v354
    %v365 = vpack.c.bf16 %v357, %v356
    %v366 = vmul.f32 %v228, %v262
    %v367 = vmul.f32 %v232, %v263
    %v368 = vmul.f32 %v238, %v264
    %v369 = vmul.f32 %v242, %v265
    %v370 = vmul.f32 %v228, %v266
    %v371 = vmul.f32 %v232, %v267
    %v372 = vmul.f32 %v238, %v268
    %v373 = vmul.f32 %v242, %v269
    %v374 = vmul.f32 %v228, %v270
    %v375 = vmul.f32 %v232, %v271
    %v376 = vmul.f32 %v238, %v272
    %v377 = vmul.f32 %v242, %v273
    %v378 = vmul.f32 %v228, %v274
    %v379 = vmul.f32 %v232, %v275
    %v380 = vmul.f32 %v238, %v276
    %v381 = vmul.f32 %v242, %v277
    %v382 = vpack.c.bf16 %v367, %v366
    %v383 = vpack.c.bf16 %v369, %v368
    %v384 = vpack.c.bf16 %v371, %v370
    %v385 = vpack.c.bf16 %v373, %v372
    %v386 = vpack.c.bf16 %v375, %v374
    %v387 = vpack.c.bf16 %v377, %v376
    %v388 = vpack.c.bf16 %v379, %v378
    %v389 = vpack.c.bf16 %v381, %v380
    %v390 = vld [vmem:[%s9] sm:$0xff]
    %v391 = vld [vmem:[%s9 + $0x8] sm:$0xff]
    %v392 = vld [vmem:[%s9 + $0x10] sm:$0xff]
    %v393 = vld [vmem:[%s9 + $0x18] sm:$0xff]
    %402 = vrot.lane.b32.xlu0 %v358, 64
    %v403 = vpop.permute.xlu0 %402
    %404 = vrot.lane.b32.xlu0 %v359, 64
    %v405 = vpop.permute.xlu0 %404
    %406 = vrot.lane.b32.xlu0 %v360, 64
    %v407 = vpop.permute.xlu0 %406
    %408 = vrot.lane.b32.xlu0 %v361, 64
    %v409 = vpop.permute.xlu0 %408
    %410 = vrot.lane.b32.xlu0 %v362, 64
    %v411 = vpop.permute.xlu0 %410
    %412 = vrot.lane.b32.xlu0 %v363, 64
    %v413 = vpop.permute.xlu0 %412
    %414 = vrot.lane.b32.xlu0 %v364, 64
    %v415 = vpop.permute.xlu0 %414
    %416 = vrot.lane.b32.xlu0 %v365, 64
    %v417 = vpop.permute.xlu0 %416
    %v419 = vsel %vm82, %v244, 0
    %v422 = vsel %vm82, %v245, 0
    %v425 = vsel %vm82, %v403, 0
    %v428 = vsel %vm82, %v405, 0
    %v431 = vsel %vm82, %v407, 0
    %v434 = vsel %vm82, %v409, 0
    %v437 = vsel %vm82, %v411, 0
    %v440 = vsel %vm82, %v413, 0
    %v443 = vsel %vm82, %v415, 0
    %v446 = vsel %vm82, %v417, 0
    %448 = vmatprep.subr.bf16.mxu0 0
    %449 = vmatpush1.bf16.xpose.msra.mxu0 %v425
    %450 = vmatprep.subr.bf16.mxu0 0
    %451 = vmatpush1.bf16.xpose.msra.mxu0 %v428
    %452 = vmatprep.subr.bf16.mxu0 0
    %453 = vmatpush1.bf16.xpose.msra.mxu0 %v431
    %454 = vmatprep.subr.bf16.mxu0 0
    %455 = vmatpush1.bf16.xpose.msra.mxu0 %v434
    %456 = vmatprep.subr.bf16.mxu0 0
    %457 = vmatpush1.bf16.xpose.msra.mxu0 %v437
    %458 = vmatprep.subr.bf16.mxu0 0
    %459 = vmatpush1.bf16.xpose.msra.mxu0 %v440
    %460 = vmatprep.subr.bf16.mxu0 0
    %461 = vmatpush1.bf16.xpose.msra.mxu0 %v443
    %462 = vmatprep.subr.bf16.mxu0 0
    %463 = vmatpush1.bf16.xpose.msra.mxu0 %v446
    %464 = vmatprep.subr.bf16.mxu0 0
    %465 = vmatpush1.bf16.xpose.msra.mxu0 0
    %466 = vmatprep.subr.bf16.mxu0 0
    %467 = vmatpush1.bf16.xpose.msra.mxu0 0
    %468 = vmatprep.subr.bf16.mxu0 0
    %469 = vmatpush1.bf16.xpose.msra.mxu0 0
    %470 = vmatprep.subr.bf16.mxu0 0
    %471 = vmatpush1.bf16.xpose.msra.mxu0 0
    %472 = vmatprep.subr.bf16.mxu0 0
    %473 = vmatpush1.bf16.xpose.msra.mxu0 0
    %474 = vmatprep.subr.bf16.mxu0 0
    %475 = vmatpush1.bf16.xpose.msra.mxu0 0
    %476 = vmatprep.subr.bf16.mxu0 0
    %477 = vmatpush1.bf16.xpose.msra.mxu0 0
    %478 = vmatprep.subr.bf16.mxu0 0
    %479 = vmatpush1.bf16.xpose.msra.mxu0 0
    %480 = vmatprep.mubr.bf16.mxu0 0
    %481 = vmatmul.mubr.bf16.gmra.mrb[0].mxu0 %v419
    %v482 = vpop.f32.mrb[0].mxu0
    %v483 = vadd.f32 %v390, %v482
    %v484 = vpop.f32.mrb[0].mxu0
    %v485 = vpop.f32.mrb[0].mxu0
    %v486 = vadd.f32 %v391, %v485
    %v487 = vpop.f32.mrb[0].mxu0
    %488 = vmatprep.mubr.bf16.mxu0 0
    %489 = vmatmul.mubr.bf16.gmra.mrb[0].mxu0 %v422
    %v490 = vpop.f32.mrb[0].mxu0
    %v491 = vadd.f32 %v392, %v490
    %v492 = vpop.f32.mrb[0].mxu0
    %v493 = vpop.f32.mrb[0].mxu0
    %v494 = vadd.f32 %v393, %v493
    %v495 = vpop.f32.mrb[0].mxu0
    %496 = vdwg.mxu0
    %v497 = vmul.f32 %v483, 1.442695
    %v498 = vpow.pop %v497
    %v499 = vmul.f32 %v486, 1.442695
    %v500 = vpow.pop %v499
    %v501 = vmul.f32 %v491, 1.442695
    %v502 = vpow.pop %v501
    %v503 = vmul.f32 %v494, 1.442695
    %v504 = vpow.pop %v503
    %v505 = vpack.c.bf16 %v500, %v498
    %v506 = vpack.c.bf16 %v504, %v502
    %507 = vmatprep.subr.bf16.mxu0 0
    %508 = vmatpush1.bf16.msra.mxu0 %v382
    %509 = vmatprep.subr.bf16.mxu0 0
    %510 = vmatpush1.bf16.msra.mxu0 %v383
    %511 = vmatprep.subr.bf16.mxu0 0
    %512 = vmatpush1.bf16.msra.mxu0 %v384
    %513 = vmatprep.subr.bf16.mxu0 0
    %514 = vmatpush1.bf16.msra.mxu0 %v385
    %515 = vmatprep.subr.bf16.mxu0 0
    %516 = vmatpush1.bf16.msra.mxu0 %v386
    %517 = vmatprep.subr.bf16.mxu0 0
    %518 = vmatpush1.bf16.msra.mxu0 %v387
    %519 = vmatprep.subr.bf16.mxu0 0
    %520 = vmatpush1.bf16.msra.mxu0 %v388
    %521 = vmatprep.subr.bf16.mxu0 0
    %522 = vmatpush1.bf16.msra.mxu0 %v389
    %523 = vmatprep.subr.bf16.mxu0 0
    %524 = vmatpush1.bf16.msra.mxu0 0
    %525 = vmatprep.subr.bf16.mxu0 0
    %526 = vmatpush1.bf16.msra.mxu0 0
    %527 = vmatprep.subr.bf16.mxu0 0
    %528 = vmatpush1.bf16.msra.mxu0 0
    %529 = vmatprep.subr.bf16.mxu0 0
    %530 = vmatpush1.bf16.msra.mxu0 0
    %531 = vmatprep.subr.bf16.mxu0 0
    %532 = vmatpush1.bf16.msra.mxu0 0
    %533 = vmatprep.subr.bf16.mxu0 0
    %534 = vmatpush1.bf16.msra.mxu0 0
    %535 = vmatprep.subr.bf16.mxu0 0
    %536 = vmatpush1.bf16.msra.mxu0 0
    %537 = vmatprep.subr.bf16.mxu0 0
    %538 = vmatpush1.bf16.msra.mxu0 0
    %539 = vmatprep.mubr.bf16.mxu0 0
    %540 = vmatmul.mubr.bf16.gmra.mrb[0].mxu0 %v505
    %v541 = vpop.f32.mrb[0].mxu0
    %v542 = vadd.f32 0.0, %v541
    %v543 = vpop.f32.mrb[0].mxu0
    %v544 = vpop.f32.mrb[0].mxu0
    %v545 = vadd.f32 0.0, %v544
    %v546 = vpop.f32.mrb[0].mxu0
    %547 = vmatprep.mubr.bf16.mxu0 0
    %548 = vmatmul.mubr.bf16.gmra.mrb[0].mxu0 %v506
    %v549 = vpop.f32.mrb[0].mxu0
    %v550 = vadd.f32 0.0, %v549
    %v551 = vpop.f32.mrb[0].mxu0
    %v552 = vpop.f32.mrb[0].mxu0
    %v553 = vadd.f32 0.0, %v552
    %v554 = vpop.f32.mrb[0].mxu0
    %555 = vdwg.mxu0
    %v572 = vunpack.c.l.b16 %v246
    %v573 = vunpack.c.l.b16 %v247
    %v574 = vunpack.c.l.b16 %v248
    %v575 = vunpack.c.l.b16 %v249
    %v576 = vunpack.c.l.b16 %v250
    %v577 = vunpack.c.l.b16 %v251
    %v578 = vunpack.c.l.b16 %v252
    %v579 = vunpack.c.l.b16 %v253
    %v580 = vunpack.c.l.b16 %v254
    %v581 = vunpack.c.l.b16 %v255
    %v582 = vunpack.c.l.b16 %v256
    %v583 = vunpack.c.l.b16 %v257
    %v584 = vunpack.c.l.b16 %v258
    %v585 = vunpack.c.l.b16 %v259
    %v586 = vunpack.c.l.b16 %v260
    %v587 = vunpack.c.l.b16 %v261
    %v588 = vpack.c.b16 %v573, %v572
    %v589 = vpack.c.b16 %v575, %v574
    %v590 = vpack.c.b16 %v577, %v576
    %v591 = vpack.c.b16 %v579, %v578
    %v592 = vpack.c.b16 %v581, %v580
    %v593 = vpack.c.b16 %v583, %v582
    %v594 = vpack.c.b16 %v585, %v584
    %v595 = vpack.c.b16 %v587, %v586
    %604 = vmatprep.subr.bf16.mxu0 0
    %605 = vmatpush1.bf16.msra.mxu0 %v588
    %606 = vmatprep.subr.bf16.mxu0 0
    %607 = vmatpush1.bf16.msra.mxu0 %v589
    %608 = vmatprep.subr.bf16.mxu0 0
    %609 = vmatpush1.bf16.msra.mxu0 %v590
    %610 = vmatprep.subr.bf16.mxu0 0
    %611 = vmatpush1.bf16.msra.mxu0 %v591
    %612 = vmatprep.subr.bf16.mxu0 0
    %613 = vmatpush1.bf16.msra.mxu0 %v592
    %614 = vmatprep.subr.bf16.mxu0 0
    %615 = vmatpush1.bf16.msra.mxu0 %v593
    %616 = vmatprep.subr.bf16.mxu0 0
    %617 = vmatpush1.bf16.msra.mxu0 %v594
    %618 = vmatprep.subr.bf16.mxu0 0
    %619 = vmatpush1.bf16.msra.mxu0 %v595
    %620 = vmatprep.subr.bf16.mxu0 0
    %621 = vmatpush1.bf16.msra.mxu0 0
    %622 = vmatprep.subr.bf16.mxu0 0
    %623 = vmatpush1.bf16.msra.mxu0 0
    %624 = vmatprep.subr.bf16.mxu0 0
    %625 = vmatpush1.bf16.msra.mxu0 0
    %626 = vmatprep.subr.bf16.mxu0 0
    %627 = vmatpush1.bf16.msra.mxu0 0
    %628 = vmatprep.subr.bf16.mxu0 0
    %629 = vmatpush1.bf16.msra.mxu0 0
    %630 = vmatprep.subr.bf16.mxu0 0
    %631 = vmatpush1.bf16.msra.mxu0 0
    %632 = vmatprep.subr.bf16.mxu0 0
    %633 = vmatpush1.bf16.msra.mxu0 0
    %634 = vmatprep.subr.bf16.mxu0 0
    %635 = vmatpush1.bf16.msra.mxu0 0
    %636 = vmatprep.mubr.bf16.mxu0 0
    %637 = vmatmul.mubr.bf16.gmra.mrb[0].mxu0 %v505
    %v638 = vpop.f32.mrb[0].mxu0
    %v639 = vadd.f32 0.0, %v638
    %v640 = vpop.f32.mrb[0].mxu0
    %v641 = vpop.f32.mrb[0].mxu0
    %v642 = vadd.f32 0.0, %v641
    %v643 = vpop.f32.mrb[0].mxu0
    %644 = vmatprep.mubr.bf16.mxu0 0
    %645 = vmatmul.mubr.bf16.gmra.mrb[0].mxu0 %v506
    %v646 = vpop.f32.mrb[0].mxu0
    %v647 = vadd.f32 0.0, %v646
    %v648 = vpop.f32.mrb[0].mxu0
    %v649 = vpop.f32.mrb[0].mxu0
    %v650 = vadd.f32 0.0, %v649
    %v651 = vpop.f32.mrb[0].mxu0
    %652 = vdwg.mxu0
    %v653 = vrcp.pop %v639
    %v654 = vrcp.pop %v642
    %v655 = vrcp.pop %v647
    %v656 = vrcp.pop %v650
    %v657 = vmul.f32 %v542, %v653
    %v658 = vmul.f32 %v545, %v654
    %v659 = vmul.f32 %v550, %v655
    %v660 = vmul.f32 %v553, %v656
    %v661 = vpack.c.bf16 %v658, %v657
    %v662 = vpack.c.bf16 %v660, %v659
    %v663 = vld [vmem:[#allocation5] sm:$0xf]
    %v664 = vld [vmem:[#allocation5 + $0x4] sm:$0xf]
    %v665 = vld [vmem:[#allocation5 + $0x8] sm:$0xf]
    %v666 = vld [vmem:[#allocation5 + $0xc] sm:$0xf]
    %v667 = vld [vmem:[#allocation5 + $0x10] sm:$0xf]
    %v668 = vld [vmem:[#allocation5 + $0x14] sm:$0xf]
    %v669 = vld [vmem:[#allocation5 + $0x18] sm:$0xf]
    %v670 = vld [vmem:[#allocation5 + $0x1c] sm:$0xf]
    %v679 = vunpack.c.l.b16 %v663
    %v680 = vunpack.c.l.b16 %v664
    %v681 = vunpack.c.l.b16 %v665
    %v682 = vunpack.c.l.b16 %v666
    %v683 = vunpack.c.l.b16 %v667
    %v684 = vunpack.c.l.b16 %v668
    %v685 = vunpack.c.l.b16 %v669
    %v686 = vunpack.c.l.b16 %v670
    %v687 = vpack.c.b16 %v680, %v679
    %v688 = vpack.c.b16 %v682, %v681
    %v689 = vpack.c.b16 %v684, %v683
    %v690 = vpack.c.b16 %v686, %v685
    %v696 = vsel %vm82, %v661, 0
    %v699 = vsel %vm82, %v662, 0
    %701 = vmatprep.subr.bf16.mxu0 0
    %702 = vmatpush1.bf16.msra.mxu0 %v687
    %703 = vmatprep.subr.bf16.mxu0 0
    %704 = vmatpush1.bf16.msra.mxu0 %v688
    %705 = vmatprep.subr.bf16.mxu0 0
    %706 = vmatpush1.bf16.msra.mxu0 %v689
    %707 = vmatprep.subr.bf16.mxu0 0
    %708 = vmatpush1.bf16.msra.mxu0 %v690
    %709 = vmatprep.subr.bf16.mxu0 0
    %710 = vmatpush1.bf16.msra.mxu0 0
    %711 = vmatprep.subr.bf16.mxu0 0
    %712 = vmatpush1.bf16.msra.mxu0 0
    %713 = vmatprep.subr.bf16.mxu0 0
    %714 = vmatpush1.bf16.msra.mxu0 0
    %715 = vmatprep.subr.bf16.mxu0 0
    %716 = vmatpush1.bf16.msra.mxu0 0
    %717 = vmatprep.subr.bf16.mxu0 0
    %718 = vmatpush1.bf16.msra.mxu0 0
    %719 = vmatprep.subr.bf16.mxu0 0
    %720 = vmatpush1.bf16.msra.mxu0 0
    %721 = vmatprep.subr.bf16.mxu0 0
    %722 = vmatpush1.bf16.msra.mxu0 0
    %723 = vmatprep.subr.bf16.mxu0 0
    %724 = vmatpush1.bf16.msra.mxu0 0
    %725 = vmatprep.subr.bf16.mxu0 0
    %726 = vmatpush1.bf16.msra.mxu0 0
    %727 = vmatprep.subr.bf16.mxu0 0
    %728 = vmatpush1.bf16.msra.mxu0 0
    %729 = vmatprep.subr.bf16.mxu0 0
    %730 = vmatpush1.bf16.msra.mxu0 0
    %731 = vmatprep.subr.bf16.mxu0 0
    %732 = vmatpush1.bf16.msra.mxu0 0
    %733 = vmatprep.mubr.bf16.mxu0 0
    %734 = vmatmul.mubr.bf16.gmra.mrb[0].mxu0 %v696
    %v735 = vpop.f32.mrb[0].mxu0
    %v736 = vadd.f32 0.0, %v735
    %v737 = vpop.f32.mrb[0].mxu0
    %v738 = vpop.f32.mrb[0].mxu0
    %v739 = vadd.f32 0.0, %v738
    %v740 = vpop.f32.mrb[0].mxu0
    %741 = vmatprep.mubr.bf16.mxu0 0
    %742 = vmatmul.mubr.bf16.gmra.mrb[0].mxu0 %v699
    %v743 = vpop.f32.mrb[0].mxu0
    %v744 = vadd.f32 0.0, %v743
    %v745 = vpop.f32.mrb[0].mxu0
    %v746 = vpop.f32.mrb[0].mxu0
    %v747 = vadd.f32 0.0, %v746
    %v748 = vpop.f32.mrb[0].mxu0
    %749 = vdwg.mxu0
    %v750 = vadd.f32 %v74, %v736
    %v751 = vadd.f32 %v75, %v739
    %v752 = vadd.f32 %v76, %v744
    %v753 = vadd.f32 %v77, %v747
    %v754 = vmul.f32 %v750, %v750
    %v755 = vmul.f32 %v751, %v751
    %v756 = vmul.f32 %v752, %v752
    %v757 = vmul.f32 %v753, %v753
    %v758 = vsel %vm82, %v754, 0.0
    %759 = vadd.xlane.f32.xlu0 %v758
    %v760 = vpop.xlane.xlu0 %759
    %v761 = vsel %vm82, %v755, 0.0
    %762 = vadd.xlane.f32.xlu0 %v761
    %v763 = vpop.xlane.xlu0 %762
    %v764 = vsel %vm82, %v756, 0.0
    %765 = vadd.xlane.f32.xlu0 %v764
    %v766 = vpop.xlane.xlu0 %765
    %v767 = vsel %vm82, %v757, 0.0
    %768 = vadd.xlane.f32.xlu0 %v767
    %v769 = vpop.xlane.xlu0 %768
    %v770 = vmul.f32 %v760, %v95
    %v771 = vmul.f32 %v763, %v95
    %v772 = vmul.f32 %v766, %v95
    %v773 = vmul.f32 %v769, %v95
    %v774 = vadd.f32 %v770, 1.1920929e-07
    %v775 = vadd.f32 %v771, 1.1920929e-07
    %v776 = vadd.f32 %v772, 1.1920929e-07
    %v777 = vadd.f32 %v773, 1.1920929e-07
    %v778 = vrsqrt.pop %v774
    %v779 = vrsqrt.pop %v775
    %v780 = vrsqrt.pop %v776
    %v781 = vrsqrt.pop %v777
    %v782 = vmul.f32 %v750, %v778
    %v783 = vmul.f32 %v751, %v779
    %v784 = vmul.f32 %v752, %v780
    %v785 = vmul.f32 %v753, %v781
    %v786 = vld [vmem:[#allocation7] sm:$0x1]
    %v788 = vlaneseq
    %v789 = vshrl.u32 %v788, 7
    %v790 = vsub.s32 0, %v789
    %v791 = vrot.slane %v786, %v790
    %v793 = vmul.f32 %v782, %v791
    %v794 = vmul.f32 %v783, %v791
    %v795 = vmul.f32 %v784, %v791
    %v796 = vmul.f32 %v785, %v791
    %v797 = vpack.c.bf16 %v794, %v793
    %v798 = vpack.c.bf16 %v796, %v795
    %v799 = vld [vmem:[%s6] sm:$0xff]
    %v800 = vld [vmem:[%s6 + $0x8] sm:$0xff]
    %v801 = vld [vmem:[%s6 + $0x10] sm:$0xff]
    %v802 = vld [vmem:[%s6 + $0x18] sm:$0xff]
    %v803 = vld [vmem:[%s6 + $0x20] sm:$0xff]
    %v804 = vld [vmem:[%s6 + $0x28] sm:$0xff]
    %v805 = vld [vmem:[%s6 + $0x30] sm:$0xff]
    %v806 = vld [vmem:[%s6 + $0x38] sm:$0xff]
    %v815 = vunpack.c.l.b16 %v799
    %v816 = vunpack.c.h.b16 %v799
    %v817 = vunpack.c.l.b16 %v800
    %v818 = vunpack.c.h.b16 %v800
    %v819 = vunpack.c.l.b16 %v801
    %v820 = vunpack.c.h.b16 %v801
    %v821 = vunpack.c.l.b16 %v802
    %v822 = vunpack.c.h.b16 %v802
    %v823 = vunpack.c.l.b16 %v803
    %v824 = vunpack.c.h.b16 %v803
    %v825 = vunpack.c.l.b16 %v804
    %v826 = vunpack.c.h.b16 %v804
    %v827 = vunpack.c.l.b16 %v805
    %v828 = vunpack.c.h.b16 %v805
    %v829 = vunpack.c.l.b16 %v806
    %v830 = vunpack.c.h.b16 %v806
    %v831 = vpack.c.b16 %v817, %v815
    %v832 = vpack.c.b16 %v818, %v816
    %v833 = vpack.c.b16 %v821, %v819
    %v834 = vpack.c.b16 %v822, %v820
    %v835 = vpack.c.b16 %v825, %v823
    %v836 = vpack.c.b16 %v826, %v824
    %v837 = vpack.c.b16 %v829, %v827
    %v838 = vpack.c.b16 %v830, %v828
    %v848 = vsel %vm82, %v797, 0
    %v851 = vsel %vm82, %v798, 0
    %853 = vmatprep.subr.bf16.mxu0 %v832
    %854 = vmatpush1.bf16.msra.mxu0 %v831
    %855 = vmatprep.subr.bf16.mxu0 %v834
    %856 = vmatpush1.bf16.msra.mxu0 %v833
    %857 = vmatprep.subr.bf16.mxu0 %v836
    %858 = vmatpush1.bf16.msra.mxu0 %v835
    %859 = vmatprep.subr.bf16.mxu0 %v838
    %860 = vmatpush1.bf16.msra.mxu0 %v837
    %861 = vmatprep.subr.bf16.mxu0 0
    %862 = vmatpush1.bf16.msra.mxu0 0
    %863 = vmatprep.subr.bf16.mxu0 0
    %864 = vmatpush1.bf16.msra.mxu0 0
    %865 = vmatprep.subr.bf16.mxu0 0
    %866 = vmatpush1.bf16.msra.mxu0 0
    %867 = vmatprep.subr.bf16.mxu0 0
    %868 = vmatpush1.bf16.msra.mxu0 0
    %869 = vmatprep.subr.bf16.mxu0 0
    %870 = vmatpush1.bf16.msra.mxu0 0
    %871 = vmatprep.subr.bf16.mxu0 0
    %872 = vmatpush1.bf16.msra.mxu0 0
    %873 = vmatprep.subr.bf16.mxu0 0
    %874 = vmatpush1.bf16.msra.mxu0 0
    %875 = vmatprep.subr.bf16.mxu0 0
    %876 = vmatpush1.bf16.msra.mxu0 0
    %877 = vmatprep.subr.bf16.mxu0 0
    %878 = vmatpush1.bf16.msra.mxu0 0
    %879 = vmatprep.subr.bf16.mxu0 0
    %880 = vmatpush1.bf16.msra.mxu0 0
    %881 = vmatprep.subr.bf16.mxu0 0
    %882 = vmatpush1.bf16.msra.mxu0 0
    %883 = vmatprep.subr.bf16.mxu0 0
    %884 = vmatpush1.bf16.msra.mxu0 0
    %885 = vmatprep.mubr.bf16.mxu0 0
    %886 = vmatmul.mubr.bf16.gmra.mrb[0].mxu0 %v848
    %v887 = vpop.f32.mrb[0].mxu0
    %v888 = vadd.f32 0.0, %v887
    %v889 = vpop.f32.mrb[0].mxu0
    %v890 = vadd.f32 0.0, %v889
    %v891 = vpop.f32.mrb[0].mxu0
    %v892 = vadd.f32 0.0, %v891
    %v893 = vpop.f32.mrb[0].mxu0
    %v894 = vadd.f32 0.0, %v893
    %895 = vmatprep.mubr.bf16.mxu0 0
    %896 = vmatmul.mubr.bf16.gmra.mrb[0].mxu0 %v851
    %v897 = vpop.f32.mrb[0].mxu0
    %v898 = vadd.f32 0.0, %v897
    %v899 = vpop.f32.mrb[0].mxu0
    %v900 = vadd.f32 0.0, %v899
    %v901 = vpop.f32.mrb[0].mxu0
    %v902 = vadd.f32 0.0, %v901
    %v903 = vpop.f32.mrb[0].mxu0
    %v904 = vadd.f32 0.0, %v903
    %905 = vdwg.mxu0
    %v906 = vxor.u32 %v888, 2147483648
    %v907 = vxor.u32 %v892, 2147483648
    %v908 = vxor.u32 %v898, 2147483648
    %v909 = vxor.u32 %v902, 2147483648
    %v910 = vmul.f32 %v906, 1.442695
    %v911 = vpow.pop %v910
    %v912 = vmul.f32 %v907, 1.442695
    %v913 = vpow.pop %v912
    %v914 = vmul.f32 %v908, 1.442695
    %v915 = vpow.pop %v914
    %v916 = vmul.f32 %v909, 1.442695
    %v917 = vpow.pop %v916
    %v918 = vadd.f32 %v911, 1.0
    %v919 = vadd.f32 %v913, 1.0
    %v920 = vadd.f32 %v915, 1.0
    %v921 = vadd.f32 %v917, 1.0
    %v922 = vrcp.pop %v918
    %v923 = vmul.f32 1.0, %v922
    %v924 = vrcp.pop %v919
    %v925 = vmul.f32 1.0, %v924
    %v926 = vrcp.pop %v920
    %v927 = vmul.f32 1.0, %v926
    %v928 = vrcp.pop %v921
    %v929 = vmul.f32 1.0, %v928
    %v930 = vmul.f32 %v888, %v923
    %v931 = vmul.f32 %v892, %v925
    %v932 = vmul.f32 %v898, %v927
    %v933 = vmul.f32 %v902, %v929
    %v934 = vmul.f32 %v930, %v890
    %v935 = vmul.f32 %v931, %v894
    %v936 = vmul.f32 %v932, %v900
    %v937 = vmul.f32 %v933, %v904
    %v938 = vpack.c.bf16 %v935, %v934
    %v939 = vpack.c.bf16 %v937, %v936
    %v940 = vld [vmem:[%s7] sm:$0xf]
    %v941 = vld [vmem:[%s7 + $0x4] sm:$0xf]
    %v942 = vld [vmem:[%s7 + $0x8] sm:$0xf]
    %v943 = vld [vmem:[%s7 + $0xc] sm:$0xf]
    %v944 = vld [vmem:[%s7 + $0x10] sm:$0xf]
    %v945 = vld [vmem:[%s7 + $0x14] sm:$0xf]
    %v946 = vld [vmem:[%s7 + $0x18] sm:$0xf]
    %v947 = vld [vmem:[%s7 + $0x1c] sm:$0xf]
    %v948 = vld [vmem:[%s7 + $0x20] sm:$0xf]
    %v949 = vld [vmem:[%s7 + $0x24] sm:$0xf]
    %v950 = vld [vmem:[%s7 + $0x28] sm:$0xf]
    %v951 = vld [vmem:[%s7 + $0x2c] sm:$0xf]
    %v952 = vld [vmem:[%s7 + $0x30] sm:$0xf]
    %v953 = vld [vmem:[%s7 + $0x34] sm:$0xf]
    %v954 = vld [vmem:[%s7 + $0x38] sm:$0xf]
    %v955 = vld [vmem:[%s7 + $0x3c] sm:$0xf]
    %v972 = vunpack.c.l.b16 %v940
    %v973 = vunpack.c.l.b16 %v941
    %v974 = vunpack.c.l.b16 %v942
    %v975 = vunpack.c.l.b16 %v943
    %v976 = vunpack.c.l.b16 %v944
    %v977 = vunpack.c.l.b16 %v945
    %v978 = vunpack.c.l.b16 %v946
    %v979 = vunpack.c.l.b16 %v947
    %v980 = vunpack.c.l.b16 %v948
    %v981 = vunpack.c.l.b16 %v949
    %v982 = vunpack.c.l.b16 %v950
    %v983 = vunpack.c.l.b16 %v951
    %v984 = vunpack.c.l.b16 %v952
    %v985 = vunpack.c.l.b16 %v953
    %v986 = vunpack.c.l.b16 %v954
    %v987 = vunpack.c.l.b16 %v955
    %v988 = vpack.c.b16 %v973, %v972
    %v989 = vpack.c.b16 %v975, %v974
    %v990 = vpack.c.b16 %v977, %v976
    %v991 = vpack.c.b16 %v979, %v978
    %v992 = vpack.c.b16 %v981, %v980
    %v993 = vpack.c.b16 %v983, %v982
    %v994 = vpack.c.b16 %v985, %v984
    %v995 = vpack.c.b16 %v987, %v986
    %1004 = vmatprep.subr.bf16.mxu0 0
    %1005 = vmatpush1.bf16.msra.mxu0 %v988
    %1006 = vmatprep.subr.bf16.mxu0 0
    %1007 = vmatpush1.bf16.msra.mxu0 %v989
    %1008 = vmatprep.subr.bf16.mxu0 0
    %1009 = vmatpush1.bf16.msra.mxu0 %v990
    %1010 = vmatprep.subr.bf16.mxu0 0
    %1011 = vmatpush1.bf16.msra.mxu0 %v991
    %1012 = vmatprep.subr.bf16.mxu0 0
    %1013 = vmatpush1.bf16.msra.mxu0 %v992
    %1014 = vmatprep.subr.bf16.mxu0 0
    %1015 = vmatpush1.bf16.msra.mxu0 %v993
    %1016 = vmatprep.subr.bf16.mxu0 0
    %1017 = vmatpush1.bf16.msra.mxu0 %v994
    %1018 = vmatprep.subr.bf16.mxu0 0
    %1019 = vmatpush1.bf16.msra.mxu0 %v995
    %1020 = vmatprep.subr.bf16.mxu0 0
    %1021 = vmatpush1.bf16.msra.mxu0 0
    %1022 = vmatprep.subr.bf16.mxu0 0
    %1023 = vmatpush1.bf16.msra.mxu0 0
    %1024 = vmatprep.subr.bf16.mxu0 0
    %1025 = vmatpush1.bf16.msra.mxu0 0
    %1026 = vmatprep.subr.bf16.mxu0 0
    %1027 = vmatpush1.bf16.msra.mxu0 0
    %1028 = vmatprep.subr.bf16.mxu0 0
    %1029 = vmatpush1.bf16.msra.mxu0 0
    %1030 = vmatprep.subr.bf16.mxu0 0
    %1031 = vmatpush1.bf16.msra.mxu0 0
    %1032 = vmatprep.subr.bf16.mxu0 0
    %1033 = vmatpush1.bf16.msra.mxu0 0
    %1034 = vmatprep.subr.bf16.mxu0 0
    %1035 = vmatpush1.bf16.msra.mxu0 0
    %1036 = vmatprep.mubr.bf16.mxu0 0
    %1037 = vmatmul.mubr.bf16.gmra.mrb[0].mxu0 %v938
    %v1038 = vpop.f32.mrb[0].mxu0
    %v1039 = vadd.f32 0.0, %v1038
    %v1040 = vpop.f32.mrb[0].mxu0
    %v1041 = vpop.f32.mrb[0].mxu0
    %v1042 = vadd.f32 0.0, %v1041
    %v1043 = vpop.f32.mrb[0].mxu0
    %1044 = vmatprep.mubr.bf16.mxu0 0
    %1045 = vmatmul.mubr.bf16.gmra.mrb[0].mxu0 %v939
    %v1046 = vpop.f32.mrb[0].mxu0
    %v1047 = vadd.f32 0.0, %v1046
    %v1048 = vpop.f32.mrb[0].mxu0
    %v1049 = vpop.f32.mrb[0].mxu0
    %v1050 = vadd.f32 0.0, %v1049
    %v1051 = vpop.f32.mrb[0].mxu0
    %1052 = vdwg.mxu0
    %v1053 = vadd.f32 %v750, %v1039
    %v1054 = vadd.f32 %v751, %v1042
    %v1055 = vadd.f32 %v752, %v1047
    %v1056 = vadd.f32 %v753, %v1050
    %1057 = vst.msk [vmem:[#allocation8] sm:$0xff] %vm82, %v1053
    %1058 = vst.msk [vmem:[#allocation8 + $0x8] sm:$0xff] %vm82, %v1054
    %1059 = vst.msk [vmem:[#allocation8 + $0x10] sm:$0xff] %vm82, %v1055
    %1060 = vst.msk [vmem:[#allocation8 + $0x18] sm:$0xff] %vm82, %v1056
    // Predicated region
    $region54: #{tpu_custom_call.1} parent=1 // pred_check
      _
    $region55: #{tpu_custom_call.1} parent=1 // pred_check_branch
      %1062 = sbr.rel (0) target = $region57
    $region56: #{tpu_custom_call.1} parent=1 // pred_region
      %s1064 = ssub.s32 512, 512
      %1065 = vsyncadd [#allocation4], %s1064
      %s1066 = sshll.u32 [#allocation8], 4
      %s1067 = int_to_ptr.vmem [resolvable:$true] %s1066
      %1072 = dma.vmem_to_hbm [thread:$0]  %s1067, 512, %s10, [#allocation4], 128, 128, 8
    $region57: #{tpu_custom_call.1} parent=1 // pred_fallthru
      _
    // Predicated region
    $region58: #{tpu_custom_call.1} parent=1 // pred_check
      _
    $region59: #{tpu_custom_call.1} parent=1 // pred_check_branch
      %1074 = sbr.rel (0) target = $region61
    $region60: #{tpu_custom_call.1} parent=1 // pred_region
      %1075 = dma.done [#allocation4], 512
    $region61: #{tpu_custom_call.1} parent=1 // pred_fallthru
      _
    %1076 = vsyncpa [#allocation3], 1
    %1077 = vsyncpa [#allocation6], 1
    %1078 = vsyncpa [#allocation4], 1

</llo_original>
